<compile_context>
chip_gen: v6e
topology: v6e:2x2x1
jax: 0.10.0
libtpu: 0.0.40
codegen_flags: <defaults>
</compile_context>

<pallas_src>
import jax
import jax.numpy as jnp
from jax.experimental import pallas as pl
from jax.experimental.pallas import tpu as pltpu


_TILE_BYTES = 4 * 1024 * 1024    # pred+gt bytes streamed per grid step (double-buffered by Pallas)
_VMEM_LIMIT = 48 * 1024 * 1024   # <= v7x 64 MiB/TC physical VMEM; ample headroom on v5e/v6e


# ------------------------------ fused Pallas kernel ------------------------------

def _make_loss_kernel(*, mode, y_dim, acc_rows, contrib_cols, tile_rows,
                      tiles_per_split, valid_rows, need_mask,
                      use_reg_logvar, use_l1):
    """Builds the fused loss kernel body for a static configuration.

    mode: "mse" | "var_slice" | "var_split_cols"
    """
    inv_y = 1.0 / float(y_dim)

    def kernel(*refs):
        idx = 0
        if mode == "var_split_cols":
            mu_ref = refs[idx]; idx += 1
            lv_ref = refs[idx]; idx += 1
            gt_ref = refs[idx]; idx += 1
        else:
            pred_ref = refs[idx]; idx += 1
            gt_ref = refs[idx]; idx += 1
        if use_reg_logvar:
            wmax_ref = refs[idx]; idx += 1
            wmin_ref = refs[idx]; idx += 1
        if use_l1:
            wlast_ref = refs[idx]; idx += 1
        out_ref = refs[idx]; idx += 1
        acc_ref = refs[idx]                      # (acc_rows, contrib_cols) f32 VMEM accumulator

        c = pl.program_id(0)                     # TensorCore split (parallel)
        i = pl.program_id(1)                     # streaming reduction step (arbitrary)

        @pl.when(i == 0)
        def _init():
            acc_ref[...] = jnp.zeros_like(acc_ref)

        gt = gt_ref[...].astype(jnp.float32)
        if mode == "var_split_cols":
            mu = mu_ref[...].astype(jnp.float32)
            logvar = lv_ref[...].astype(jnp.float32)
            contrib = (mu - gt) ** 2 * jnp.exp(-logvar) + logvar
        elif mode == "var_slice":
            mu = pred_ref[:, :y_dim].astype(jnp.float32)
            logvar = pred_ref[:, y_dim:].astype(jnp.float32)
            contrib = (mu - gt) ** 2 * jnp.exp(-logvar) + logvar
        else:  # "mse" (possibly a lane-dense (-1, 128) slab)
            contrib = (pred_ref[...].astype(jnp.float32) - gt) ** 2

        if need_mask:
            # Zero rows whose logical index falls past the valid range (ragged tail /
            # over-covering tiles from the 2-core split).  Garbage (even NaN/Inf) in the
            # padded region is discarded by the select.
            tile_start = (c * tiles_per_split + i) * tile_rows
            row_ids = jax.lax.broadcasted_iota(jnp.int32, (tile_rows, contrib_cols), 0)
            contrib = jnp.where(row_ids + tile_start < valid_rows, contrib, 0.0)

        # Per-step accumulation stays on the VPU (vreg adds); all cross-lane/cross-sublane
        # reduction is deferred past the grid (tiny wrapper-side jnp.sum of the output slab).
        if tile_rows % 8 == 0:
            acc_ref[...] += contrib.reshape(tile_rows // 8, 8, contrib_cols).sum(axis=0)
        else:  # single small tile (tile_rows == full n_rows < 8 or not a sublane multiple)
            acc_ref[...] += jnp.sum(contrib, axis=0, keepdims=True)

        @pl.when(i == tiles_per_split - 1)
        def _finalize():
            res = acc_ref[...] * jnp.float32(inv_y)
            if use_reg_logvar or use_l1:
                wterm = jnp.float32(0.0)
                if use_reg_logvar:
                    wterm = wterm + 0.01 * (
                        jnp.sum(wmax_ref[...].astype(jnp.float32))
                        - jnp.sum(wmin_ref[...].astype(jnp.float32)))
                if use_l1:
                    wterm = wterm + jnp.sum(jnp.abs(wlast_ref[...].astype(jnp.float32)))
                # Add the weight terms exactly once (split 0, element [0, 0]).
                gate = (c == 0).astype(jnp.float32)
                rid = jax.lax.broadcasted_iota(jnp.int32, (acc_rows, contrib_cols), 0)
                cid = jax.lax.broadcasted_iota(jnp.int32, (acc_rows, contrib_cols), 1)
                res = res + jnp.where((rid == 0) & (cid == 0), wterm * gate, 0.0)
            out_ref[...] = res

    return kernel


def _reshape_weight(w):
    """Lane/sublane-dense presentation of a weight tensor for the finalize reduce."""
    w = jnp.asarray(w)
    n = w.size
    if n >= 128 and n % 128 == 0:
        return w.reshape(n // 128, 128)
    return w.reshape(1, n)


def task_loss_fused(pred, gt, *, y_dim, out_var, add_reg_logvar, reg_lambda,
                    max_logvar=None, min_logvar=None, last_weight=None):
    """Single fused pallas_call computing the full TaskLoss scalar (f32)."""
    pred2 = pred.reshape(-1, pred.shape[-1])
    gt2 = gt.reshape(-1, gt.shape[-1])
    n_rows = pred2.shape[0]
    gt_cols = gt2.shape[-1]

    use_reg_logvar = bool(out_var and add_reg_logvar
                          and max_logvar is not None and min_logvar is not None)
    use_l1 = bool(reg_lambda != 0) and last_weight is not None

    # Degenerate empty batch: the grid would never run and the output would be undefined.
    if n_rows == 0 or pred2.shape[-1] == 0:
        loss = jnp.float32(0.0)
        if use_reg_logvar:
            loss = loss + 0.01 * (jnp.sum(max_logvar).astype(jnp.float32)
                                  - jnp.sum(min_logvar).astype(jnp.float32))
        if use_l1:
            loss = loss + jnp.sum(jnp.abs(last_weight)).astype(jnp.float32)
        return loss

    # ---- choose layout / mode (no HBM copies: reshapes of contiguous arrays are free) ----
    if out_var:
        mode = "var_split_cols" if (y_dim % 128 == 0) else "var_slice"
        data_rows = n_rows
        contrib_cols = y_dim
        bytes_per_row = pred2.dtype.itemsize * pred2.shape[-1] + gt2.dtype.itemsize * gt_cols
    else:
        mode = "mse"
        total = n_rows * gt_cols
        if gt_cols < 128 and total >= 128 and total % 128 == 0:
            # lane-dense slab: full vreg/DMA occupancy for narrow y_dim
            pred2 = pred2.reshape(total // 128, 128)
            gt2 = gt2.reshape(total // 128, 128)
        data_rows = pred2.shape[0]
        contrib_cols = pred2.shape[-1]
        bytes_per_row = (pred2.dtype.itemsize + gt2.dtype.itemsize) * pred2.shape[-1]

    # ---- row-tile size from a byte budget (keeps per-step DMA >> per-step overhead) ----
    budget_rows = max(8, (_TILE_BYTES // max(bytes_per_row, 1)) // 8 * 8)
    if data_rows <= budget_rows:
        tile_rows = data_rows          # single tile; "equal to full dim" is always a legal block
        tiles_total = 1
    else:
        tile_rows = budget_rows        # multiple of 8
        tiles_total = pl.cdiv(data_rows, tile_rows)

    num_splits = 2 if tiles_total >= 2 else 1          # v7x: one split per TensorCore
    tiles_per_split = pl.cdiv(tiles_total, num_splits)
    need_mask = (num_splits * tiles_per_split * tile_rows) != data_rows
    acc_rows = 8 if tile_rows % 8 == 0 else 1
    last_block = tiles_total - 1

    def _row_block(c, i):
        # Clamp so no DMA ever targets a fully out-of-range block (the row mask zeroes it).
        return jnp.minimum(c * tiles_per_split + i, last_block)

    inputs = []
    in_specs = []
    if mode == "var_split_cols":
        # mu / logvar arrive as separate column-block DMAs -> no in-kernel lane slice.
        inputs += [pred2, pred2, gt2]
        in_specs += [
            pl.BlockSpec((tile_rows, y_dim), lambda c, i: (_row_block(c, i), 0)),
            pl.BlockSpec((tile_rows, y_dim), lambda c, i: (_row_block(c, i), 1)),
            pl.BlockSpec((tile_rows, gt_cols), lambda c, i: (_row_block(c, i), 0)),
        ]
    else:
        inputs += [pred2, gt2]
        in_specs += [
            pl.BlockSpec((tile_rows, pred2.shape[-1]), lambda c, i: (_row_block(c, i), 0)),
            pl.BlockSpec((tile_rows, gt2.shape[-1]), lambda c, i: (_row_block(c, i), 0)),
        ]
    if use_reg_logvar:
        wmax = _reshape_weight(max_logvar)
        wmin = _reshape_weight(min_logvar)
        inputs += [wmax, wmin]
        in_specs += [pl.BlockSpec(wmax.shape, lambda c, i: (0, 0)),
                     pl.BlockSpec(wmin.shape, lambda c, i: (0, 0))]
    if use_l1:
        wlast = _reshape_weight(last_weight)
        inputs.append(wlast)
        in_specs.append(pl.BlockSpec(wlast.shape, lambda c, i: (0, 0)))

    kernel = _make_loss_kernel(
        mode=mode, y_dim=y_dim, acc_rows=acc_rows, contrib_cols=contrib_cols,
        tile_rows=tile_rows, tiles_per_split=tiles_per_split,
        valid_rows=data_rows, need_mask=need_mask,
        use_reg_logvar=use_reg_logvar, use_l1=use_l1)

    out = pl.pallas_call(
        kernel,
        out_shape=jax.ShapeDtypeStruct((num_splits * acc_rows, contrib_cols), jnp.float32),
        grid_spec=pltpu.PrefetchScalarGridSpec(
            num_scalar_prefetch=0,
            grid=(num_splits, tiles_per_split),
            in_specs=in_specs,
            out_specs=pl.BlockSpec((acc_rows, contrib_cols), lambda c, i: (c, 0)),
            scratch_shapes=[pltpu.VMEM((acc_rows, contrib_cols), jnp.float32)],
        ),
        compiler_params=pltpu.CompilerParams(
            dimension_semantics=("parallel", "arbitrary"),
            vmem_limit_bytes=_VMEM_LIMIT,
        ),
    )(*inputs)

    # Tiny (<= 2 x 8 x 128 f32) final cross-lane/sublane reduce of the per-core partial slabs.
    return jnp.sum(out)


# --------------------------------- module equivalent ---------------------------------

class TaskLossMT:
    """JAX/Pallas equivalent of TaskLossMT.forward (no dataloader replay)."""

    def __init__(self, out_var, out_dim, mlp_var_minmax, reg_lambda, task_id=0):
        self.out_var = out_var
        self.y_dim = out_dim
        self.mlp_var_minmax = mlp_var_minmax
        self.reg_norm = 1
        self.reg_lambda = reg_lambda
        self.task_id = task_id

    def forward(self, pred, gt, weights, add_reg_logvar=True):
        del add_reg_logvar  # faithful: TaskLossMT.forward calls the base loss with its default (True)
        if self.out_var and not self.mlp_var_minmax:
            max_lv, min_lv = weights[0], weights[1]
        else:
            max_lv = min_lv = None
            # TODO(synk): mlp_var_minmax=True reads mnet.mlp_max_logvar / mlp_min_logvar from the
            # external mnet module; not representable here.
        # regularize(): PyTorch overwrites `loss` per weight -> only weights[-1]'s L1 survives,
        # and reg_lambda only gates (it never scales the term).
        last_w = weights[-1] if (self.reg_lambda != 0 and len(weights) > 0) else None
        loss = task_loss_fused(
            pred, gt,
            y_dim=self.y_dim, out_var=self.out_var, add_reg_logvar=True,
            reg_lambda=self.reg_lambda,
            max_logvar=max_lv, min_logvar=min_lv, last_weight=last_w)
        # TODO(synk): replay() over old tasks needs DataLoader iteration plus hnet/mnet forward
        # passes (external modules); task_id=0 here so the loop is empty.
        for _tid in range(self.task_id):
            pass
        return loss


# ----------------------------------------- demo -----------------------------------------

if __name__ == "__main__":
    key = jax.random.PRNGKey(0)
    k1, k2, k3, k4, k5, k6, k7 = jax.random.split(key, 7)

    B, Y = 8, 16                       # batch, out_dim (y_dim)
    pred = jax.random.normal(k1, (B, 2 * Y), dtype=jnp.float32)   # [mu | logvar]
    gt = jax.random.normal(k2, (B, Y), dtype=jnp.float32)

    # deterministic synthetic "mnet weights": [max_logvar, min_logvar, W, b]
    weights = [
        0.5 * jax.random.normal(k3, (1, Y), dtype=jnp.float32),   # max_logvar
        0.5 * jax.random.normal(k4, (1, Y), dtype=jnp.float32),   # min_logvar
        jax.random.normal(k5, (2 * Y, 32), dtype=jnp.float32),    # some layer weight (unused by loss)
        jax.random.normal(k6, (32,), dtype=jnp.float32),          # some layer bias (last -> L1)
    ]

    # --- out_var=True path ---
    loss_mod = TaskLossMT(out_var=True, out_dim=Y, mlp_var_minmax=False,
                          reg_lambda=1.0, task_id=0)
    loss = jax.block_until_ready(loss_mod.forward(pred, gt, weights))

    mu_r, lv_r = pred[:, :Y], pred[:, Y:]
    ref = jnp.sum((mu_r - gt) ** 2 * jnp.exp(-lv_r) + lv_r) / Y
    ref = ref + 0.01 * (jnp.sum(weights[0]) - jnp.sum(weights[1]))
    ref = ref + jnp.sum(jnp.abs(weights[-1]))
    assert jnp.allclose(loss, ref, rtol=1e-5, atol=1e-5), (loss, ref)

    # --- out_var=False (MSE) path ---
    pred_mse = jax.random.normal(k7, (B, Y), dtype=jnp.float32)
    loss_mod2 = TaskLossMT(out_var=False, out_dim=Y, mlp_var_minmax=False,
                           reg_lambda=1.0, task_id=0)
    loss2 = jax.block_until_ready(loss_mod2.forward(pred_mse, gt, weights))
    ref2 = jnp.sum((pred_mse - gt) ** 2) / Y + jnp.sum(jnp.abs(weights[-1]))
    assert jnp.allclose(loss2, ref2, rtol=1e-5, atol=1e-5), (loss2, ref2)

    print("KERNEL_OK")
</pallas_src>

<mosaic_0001>
module attributes {stable_mosaic.version = 11 : i64} {
  func.func @kernel(%arg0: i32, %arg1: i32, %arg2: memref<8x32xf32, #tpu.memory_space<vmem>>, %arg3: memref<8x16xf32, #tpu.memory_space<vmem>>, %arg4: memref<1x16xf32, #tpu.memory_space<vmem>>, %arg5: memref<1x16xf32, #tpu.memory_space<vmem>>, %arg6: memref<1x32xf32, #tpu.memory_space<vmem>>, %arg7: memref<8x16xf32, #tpu.memory_space<vmem>>, %arg8: memref<8x16xf32, #tpu.memory_space<vmem>>) attributes {dimension_semantics = [#tpu.dimension_semantics<parallel>, #tpu.dimension_semantics<arbitrary>], iteration_bounds = array<i64: 1, 1>, scalar_prefetch = 0 : i64, scratch_operands = 1 : i64, tpu.core_type = #tpu.core_type<tc>, window_params = [{transform_indices = @transform_0, window_bounds = array<i64: 8, 32>}, {transform_indices = @transform_1, window_bounds = array<i64: 8, 16>}, {pipeline_mode = #tpu.pipeline_mode<synchronous>, transform_indices = @transform_2, window_bounds = array<i64: 1, 16>}, {pipeline_mode = #tpu.pipeline_mode<synchronous>, transform_indices = @transform_3, window_bounds = array<i64: 1, 16>}, {pipeline_mode = #tpu.pipeline_mode<synchronous>, transform_indices = @transform_4, window_bounds = array<i64: 1, 32>}, {transform_indices = @transform_5, window_bounds = array<i64: 8, 16>}]} {
    %c0_i32 = arith.constant 0 : i32
    %0 = arith.cmpi eq, %arg1, %c0_i32 : i32
    %1 = arith.extui %0 : i1 to i32
    %c0_i32_0 = arith.constant 0 : i32
    %2 = arith.cmpi ne, %1, %c0_i32_0 : i32
    scf.if %2 {
      %cst_12 = arith.constant 0.000000e+00 : f32
      %21 = vector.broadcast %cst_12 : f32 to vector<8x16xf32>
      %c0_13 = arith.constant 0 : index
      %c0_14 = arith.constant 0 : index
      %22 = vector.load %arg8[%c0_13, %c0_14] : memref<8x16xf32, #tpu.memory_space<vmem>>, vector<8x16xf32>
      tpu.vector_store %arg8[%c0_13, %c0_14], %21 {strides = array<i32>} : memref<8x16xf32, #tpu.memory_space<vmem>>, vector<8x16xf32>,
    } else {
    }
    %c0 = arith.constant 0 : index
    %c0_1 = arith.constant 0 : index
    %3 = vector.load %arg3[%c0, %c0_1] : memref<8x16xf32, #tpu.memory_space<vmem>>, vector<8x16xf32>
    %c0_2 = arith.constant 0 : index
    %c0_3 = arith.constant 0 : index
    %4 = vector.load %arg2[%c0_2, %c0_3] : memref<8x32xf32, #tpu.memory_space<vmem>>, vector<8x16xf32>
    %c0_4 = arith.constant 0 : index
    %c16 = arith.constant 16 : index
    %5 = vector.load %arg2[%c0_4, %c16] : memref<8x32xf32, #tpu.memory_space<vmem>>, vector<8x16xf32>
    %6 = arith.subf %4, %3 : vector<8x16xf32>
    %7 = arith.mulf %6, %6 : vector<8x16xf32>
    %cst = arith.constant 0.000000e+00 : f32
    %8 = vector.broadcast %cst : f32 to vector<8x16xf32>
    %9 = arith.subf %8, %5 : vector<8x16xf32>
    %10 = math.exp %9 : vector<8x16xf32>
    %11 = arith.mulf %7, %10 : vector<8x16xf32>
    %12 = arith.addf %11, %5 : vector<8x16xf32>
    %c0_5 = arith.constant 0 : index
    %c0_6 = arith.constant 0 : index
    %13 = vector.load %arg8[%c0_5, %c0_6] : memref<8x16xf32, #tpu.memory_space<vmem>>, vector<8x16xf32>
    %14 = vector.shape_cast %12 : vector<8x16xf32> to vector<1x8x16xf32>
    %cst_7 = arith.constant dense<0.000000e+00> : vector<8x16xf32>
    %15 = vector.multi_reduction <add>, %14, %cst_7 [0] : vector<1x8x16xf32> to vector<8x16xf32>
    %16 = arith.addf %13, %15 : vector<8x16xf32>
    %c0_8 = arith.constant 0 : index
    %c0_9 = arith.constant 0 : index
    %17 = vector.load %arg8[%c0_8, %c0_9] : memref<8x16xf32, #tpu.memory_space<vmem>>, vector<8x16xf32>
    tpu.vector_store %arg8[%c0_8, %c0_9], %16 {strides = array<i32>} : memref<8x16xf32, #tpu.memory_space<vmem>>, vector<8x16xf32>,
    %c0_i32_10 = arith.constant 0 : i32
    %18 = arith.cmpi eq, %arg1, %c0_i32_10 : i32
    %19 = arith.extui %18 : i1 to i32
    %c0_i32_11 = arith.constant 0 : i32
    %20 = arith.cmpi ne, %19, %c0_i32_11 : i32
    scf.if %20 {
      %c0_12 = arith.constant 0 : index
      %c0_13 = arith.constant 0 : index
      %21 = vector.load %arg8[%c0_12, %c0_13] : memref<8x16xf32, #tpu.memory_space<vmem>>, vector<8x16xf32>
      %cst_14 = arith.constant 6.250000e-02 : f32
      %22 = vector.broadcast %cst_14 : f32 to vector<8x16xf32>
      %23 = arith.mulf %21, %22 : vector<8x16xf32>
      %c0_15 = arith.constant 0 : index
      %c0_16 = arith.constant 0 : index
      %24 = vector.load %arg4[%c0_15, %c0_16] : memref<1x16xf32, #tpu.memory_space<vmem>>, vector<1x16xf32>
      %25 = vector.shape_cast %24 : vector<1x16xf32> to vector<1x1x16xf32>
      %cst_17 = arith.constant dense<0.000000e+00> : vector<1xf32>
      %26 = vector.multi_reduction <add>, %25, %cst_17 [1, 2] : vector<1x1x16xf32> to vector<1xf32>
      %27 = vector.shape_cast %26 : vector<1xf32> to vector<1x1x1xf32>
      %28 = vector.extract %27[0, 0, 0] : f32 from vector<1x1x1xf32>
      %c0_18 = arith.constant 0 : index
      %c0_19 = arith.constant 0 : index
      %29 = vector.load %arg5[%c0_18, %c0_19] : memref<1x16xf32, #tpu.memory_space<vmem>>, vector<1x16xf32>
      %30 = vector.shape_cast %29 : vector<1x16xf32> to vector<1x1x16xf32>
      %cst_20 = arith.constant dense<0.000000e+00> : vector<1xf32>
      %31 = vector.multi_reduction <add>, %30, %cst_20 [1, 2] : vector<1x1x16xf32> to vector<1xf32>
      %32 = vector.shape_cast %31 : vector<1xf32> to vector<1x1x1xf32>
      %33 = vector.extract %32[0, 0, 0] : f32 from vector<1x1x1xf32>
      %34 = arith.subf %28, %33 : f32
      %cst_21 = arith.constant 0.00999999977 : f32
      %35 = arith.mulf %cst_21, %34 : f32
      %cst_22 = arith.constant 0.000000e+00 : f32
      %36 = arith.addf %cst_22, %35 : f32
      %c0_23 = arith.constant 0 : index
      %c0_24 = arith.constant 0 : index
      %37 = vector.load %arg6[%c0_23, %c0_24] : memref<1x32xf32, #tpu.memory_space<vmem>>, vector<1x32xf32>
      %38 = math.absf %37 : vector<1x32xf32>
      %39 = vector.shape_cast %38 : vector<1x32xf32> to vector<1x1x32xf32>
      %cst_25 = arith.constant dense<0.000000e+00> : vector<1xf32>
      %40 = vector.multi_reduction <add>, %39, %cst_25 [1, 2] : vector<1x1x32xf32> to vector<1xf32>
      %41 = vector.shape_cast %40 : vector<1xf32> to vector<1x1x1xf32>
      %42 = vector.extract %41[0, 0, 0] : f32 from vector<1x1x1xf32>
      %43 = arith.addf %36, %42 : f32
      %c0_i32_26 = arith.constant 0 : i32
      %44 = arith.cmpi eq, %arg0, %c0_i32_26 : i32
      %45 = arith.extui %44 : i1 to i32
      %46 = arith.sitofp %45 : i32 to f32
      %47 = tpu.iota {dimensions = array<i32: 0>} : vector<8x16xi32>
      %48 = tpu.iota {dimensions = array<i32: 1>} : vector<8x16xi32>
      %c0_i32_27 = arith.constant 0 : i32
      %49 = vector.broadcast %c0_i32_27 : i32 to vector<8x16xi32>
      %50 = arith.cmpi eq, %47, %49 : vector<8x16xi32>
      %c0_i32_28 = arith.constant 0 : i32
      %51 = vector.broadcast %c0_i32_28 : i32 to vector<8x16xi32>
      %52 = arith.cmpi eq, %48, %51 : vector<8x16xi32>
      %53 = arith.andi %50, %52 : vector<8x16xi1>
      %54 = arith.mulf %43, %46 : f32
      %cst_29 = arith.constant 0.000000e+00 : f32
      %55 = vector.broadcast %54 : f32 to vector<8x16xf32>
      %56 = vector.broadcast %cst_29 : f32 to vector<8x16xf32>
      %57 = arith.select %53, %55, %56 : vector<8x16xi1>, vector<8x16xf32>
      %58 = arith.addf %23, %57 : vector<8x16xf32>
      %c0_30 = arith.constant 0 : index
      %c0_31 = arith.constant 0 : index
      %59 = vector.load %arg7[%c0_30, %c0_31] : memref<8x16xf32, #tpu.memory_space<vmem>>, vector<8x16xf32>
      tpu.vector_store %arg7[%c0_30, %c0_31], %58 {strides = array<i32>} : memref<8x16xf32, #tpu.memory_space<vmem>>, vector<8x16xf32>,
    } else {
    }
    return
  }
  func.func @transform_0(%arg0: i32, %arg1: i32) -> (i32, i32) {
    %c1_i32 = arith.constant 1 : i32
    %0 = arith.muli %arg0, %c1_i32 : i32
    %1 = arith.addi %0, %arg1 : i32
    %c0_i32 = arith.constant 0 : i32
    %2 = arith.minsi %1, %c0_i32 : i32
    %c0_i32_0 = arith.constant 0 : i32
    %c0_i32_1 = arith.constant 0 : i32
    return %2, %c0_i32_0 : i32, i32
  }
  func.func @transform_1(%arg0: i32, %arg1: i32) -> (i32, i32) {
    %c1_i32 = arith.constant 1 : i32
    %0 = arith.muli %arg0, %c1_i32 : i32
    %1 = arith.addi %0, %arg1 : i32
    %c0_i32 = arith.constant 0 : i32
    %2 = arith.minsi %1, %c0_i32 : i32
    %c0_i32_0 = arith.constant 0 : i32
    %c0_i32_1 = arith.constant 0 : i32
    return %2, %c0_i32_0 : i32, i32
  }
  func.func @transform_2(%arg0: i32, %arg1: i32) -> (i32, i32) {
    %c0_i32 = arith.constant 0 : i32
    %c0_i32_0 = arith.constant 0 : i32
    %c0_i32_1 = arith.constant 0 : i32
    return %c0_i32, %c0_i32_0 : i32, i32
  }
  func.func @transform_3(%arg0: i32, %arg1: i32) -> (i32, i32) {
    %c0_i32 = arith.constant 0 : i32
    %c0_i32_0 = arith.constant 0 : i32
    %c0_i32_1 = arith.constant 0 : i32
    return %c0_i32, %c0_i32_0 : i32, i32
  }
  func.func @transform_4(%arg0: i32, %arg1: i32) -> (i32, i32) {
    %c0_i32 = arith.constant 0 : i32
    %c0_i32_0 = arith.constant 0 : i32
    %c0_i32_1 = arith.constant 0 : i32
    return %c0_i32, %c0_i32_0 : i32, i32
  }
  func.func @transform_5(%arg0: i32, %arg1: i32) -> (i32, i32) {
    %c0_i32 = arith.constant 0 : i32
    %c0_i32_0 = arith.constant 0 : i32
    return %arg0, %c0_i32 : i32, i32
  }
}

</mosaic_0001>

<llo_original>
// kernel: tpu_custom_call.1
$region0: #{tpu_custom_call.1}
  #allocation0 [shape = 'u32[]', space=smem, size = 0x4, offset = 0x4, fixed_abs, tag = 'smem constant byte address 0x4 - core index']
  #allocation1 [shape = 'u32[144,128]{1,0:T(1,128)}', space=vmem, size = 0x12000, scoped, tag = 'internal scratch']
  #allocation2 [shape = 'f32[8,16]{1,0:T(8,128)}', space=vmem, size = 0x1000, scoped, tag = 'scratch operand']
  %s0 = inlined_call_operand.hbm [shape: f32[8,32], index: 0, kind: input, shape index: {}]
  %s1 = inlined_call_operand.hbm [shape: f32[8,16], index: 1, kind: input, shape index: {}]
  %s2 = inlined_call_operand.vmem [shape: f32[1,16], index: 2, kind: input, shape index: {}]
  %s3 = inlined_call_operand.vmem [shape: f32[1,16], index: 3, kind: input, shape index: {}]
  %s4 = inlined_call_operand.vmem [shape: f32[1,32], index: 4, kind: input, shape index: {}]
  %s5 = inlined_call_operand.hbm [shape: f32[8,16], index: 5, kind: output, shape index: {}]
  %s6 = sld [smem:[#allocation0]]
  $region46: #{tpu_custom_call.1} parent=0
    _
  %s8 = ssub.s32 1, %s6
  %s9 = scalar_select 0, %s8, %s6
  $region1: #{tpu_custom_call.1} parent=0
    #allocation3 [shape = 'u8[4096]{0}', space=vmem, size = 0x1000, scoped, tag = 'input window, operand 0, single buffered']
    #allocation4 [shape = 's32[1]{0}', space=sflag, size = 0x4, scoped, tag = 'scoped memory for tpu_custom_call.1']
    #allocation5 [shape = 's32[1]{0}', space=sflag, size = 0x4, scoped, tag = 'scoped memory for tpu_custom_call.1']
    #allocation6 [shape = 'u8[4096]{0}', space=vmem, size = 0x1000, scoped, tag = 'input window, operand 1, single buffered']
    #allocation7 [shape = 's32[1]{0}', space=sflag, size = 0x4, scoped, tag = 'scoped memory for tpu_custom_call.1']
    #allocation8 [shape = 'u8[4096]{0}', space=vmem, size = 0x1000, scoped, tag = 'output window, operand 0, single buffered']
    %10 = vsyncpa [#allocation4], 0
    %11 = vsyncpa [#allocation7], 0
    %12 = vsyncpa [#allocation5], 0
    // Predicated region
    $region2: #{tpu_custom_call.1} parent=1 // pred_check
      _
    $region3: #{tpu_custom_call.1} parent=1 // pred_check_branch
      %14 = sbr.rel (0) target = $region5
    $region4: #{tpu_custom_call.1} parent=1 // pred_region
      %s15 = sadd.s32 0, 0
      %p16 = scmp.lt.s32.totalorder %s15, 0
      %s17 = scalar_select %p16, %s15, 0
      %s19 = ssub.s32 128, 128
      %20 = vsyncadd [#allocation4], %s19
      %s21 = smul.addr %s17, 128
      %s22 = scalar_lea.hbm %s0, %s21
      %s24 = sshll.u32 [#allocation3], 4
      %s25 = int_to_ptr.vmem [resolvable:$true] %s24
      %27 = dma.hbm_to_vmem [thread:$0]  %s22, 128, %s25, [#allocation4]
    $region5: #{tpu_custom_call.1} parent=1 // pred_fallthru
      _
    // Predicated region
    $region6: #{tpu_custom_call.1} parent=1 // pred_check
      _
    $region7: #{tpu_custom_call.1} parent=1 // pred_check_branch
      %29 = sbr.rel (0) target = $region9
    $region8: #{tpu_custom_call.1} parent=1 // pred_region
      %s30 = sadd.s32 0, 0
      %p31 = scmp.lt.s32.totalorder %s30, 0
      %s32 = scalar_select %p31, %s30, 0
      %s34 = ssub.s32 128, 128
      %35 = vsyncadd [#allocation7], %s34
      %s36 = smul.addr %s32, 128
      %s37 = scalar_lea.hbm %s1, %s36
      %s39 = sshll.u32 [#allocation6], 4
      %s40 = int_to_ptr.vmem [resolvable:$true] %s39
      %42 = dma.hbm_to_vmem [thread:$0]  %s37, 128, %s40, [#allocation7]
    $region9: #{tpu_custom_call.1} parent=1 // pred_fallthru
      _
    // Predicated region
    $region10: #{tpu_custom_call.1} parent=1 // pred_check
      _
    $region11: #{tpu_custom_call.1} parent=1 // pred_check_branch
      %44 = sbr.rel (0) target = $region13
    $region12: #{tpu_custom_call.1} parent=1 // pred_region
      _
    $region13: #{tpu_custom_call.1} parent=1 // pred_fallthru
      _
    // Predicated region
    $region14: #{tpu_custom_call.1} parent=1 // pred_check
      _
    $region15: #{tpu_custom_call.1} parent=1 // pred_check_branch
      %46 = sbr.rel (0) target = $region17
    $region16: #{tpu_custom_call.1} parent=1 // pred_region
      _
    $region17: #{tpu_custom_call.1} parent=1 // pred_fallthru
      _
    // Predicated region
    $region18: #{tpu_custom_call.1} parent=1 // pred_check
      _
    $region19: #{tpu_custom_call.1} parent=1 // pred_check_branch
      %48 = sbr.rel (0) target = $region21
    $region20: #{tpu_custom_call.1} parent=1 // pred_region
      _
    $region21: #{tpu_custom_call.1} parent=1 // pred_fallthru
      _
    // Predicated region
    $region22: #{tpu_custom_call.1} parent=1 // pred_check
      _
    $region23: #{tpu_custom_call.1} parent=1 // pred_check_branch
      %50 = sbr.rel (0) target = $region25
    $region24: #{tpu_custom_call.1} parent=1 // pred_region
      %51 = dma.done [#allocation4], 128
    $region25: #{tpu_custom_call.1} parent=1 // pred_fallthru
      _
    // Predicated region
    $region26: #{tpu_custom_call.1} parent=1 // pred_check
      _
    $region27: #{tpu_custom_call.1} parent=1 // pred_check_branch
      %53 = sbr.rel (0) target = $region29
    $region28: #{tpu_custom_call.1} parent=1 // pred_region
      %54 = dma.done [#allocation7], 128
    $region29: #{tpu_custom_call.1} parent=1 // pred_fallthru
      _
    %s55 = sadd.s32 0, 0
    %p56 = scmp.lt.s32.totalorder %s55, 0
    %s57 = scalar_select %p56, %s55, 0
    %s58 = sadd.s32 0, 0
    %p59 = scmp.lt.s32.totalorder %s58, 0
    %s60 = scalar_select %p59, %s58, 0
    %p61 = scmp.eq.s32.totalorder 0, 0
    // Predicated region
    $region30: #{tpu_custom_call.1} parent=1 // pred_check
      %p62 = pneg %p61
    $region31: #{tpu_custom_call.1} parent=1 // pred_check_branch
      %64 = sbr.rel (%p62) target = $region33
    $region32: #{tpu_custom_call.1} parent=1 // pred_region
      %vm65 = vcmask 130048
      %66 = vst.msk [vmem:[#allocation2] sm:$0xff] %vm65, 0.0
    $region33: #{tpu_custom_call.1} parent=1 // pred_fallthru
      _
    %v67 = vld [vmem:[#allocation6] sm:$0xff]
    %v68 = vld [vmem:[#allocation3] sm:$0xff]
    %v69 = vsub.f32 %v68, %v67
    %v70 = vmul.f32 %v69, %v69
    %v71 = vsub.f32 0.0, %v68
    %v72 = vmul.f32 %v71, 1.442695
    %v73 = vpow.pop %v72
    %75 = vrot.lane.b32.xlu0 %v73, 112
    %v76 = vpop.permute.xlu0 %75
    %v78 = vmul.f32 %v70, %v76
    %80 = vrot.lane.b32.xlu0 %v68, 112
    %v81 = vpop.permute.xlu0 %80
    %v83 = vadd.f32 %v78, %v81
    %v84 = vld [vmem:[#allocation2] sm:$0xff]
    %v85 = vadd.f32 %v83, 0.0
    %v86 = vadd.f32 %v84, %v85
    %vm87 = vcmask 130048
    %88 = vst.msk [vmem:[#allocation2] sm:$0xff] %vm87, %v86
    // Predicated region
    $region34: #{tpu_custom_call.1} parent=1 // pred_check
      %p89 = pneg %p61
    $region35: #{tpu_custom_call.1} parent=1 // pred_check_branch
      %91 = sbr.rel (%p89) target = $region37
    $region36: #{tpu_custom_call.1} parent=1 // pred_region
      %v92 = vld [vmem:[#allocation2] sm:$0xff]
      %v93 = vmul.f32 %v92, 0.0625
      %v94 = vld [vmem:[%s2] sm:$0x1]
      %vm95 = vcmask 122880
      %v96 = vsel %vm95, %v94, 0.0
      %97 = vadd.xlane.f32.xlu0 %v96
      %v98 = vpop.xlane.xlu0 %97
      %v99 = vrot.slane %v98, 4
      %v100 = vadd.f32 %v98, %v99
      %v101 = vrot.slane %v100, 2
      %v102 = vadd.f32 %v100, %v101
      %v103 = vrot.slane %v102, 1
      %v104 = vadd.f32 %v102, %v103
      %s105 = vtos %v104
      %v106 = vld [vmem:[%s3] sm:$0x1]
      %v107 = vsel %vm95, %v106, 0.0
      %108 = vadd.xlane.f32.xlu0 %v107
      %v109 = vpop.xlane.xlu0 %108
      %v110 = vrot.slane %v109, 4
      %v111 = vadd.f32 %v109, %v110
      %v112 = vrot.slane %v111, 2
      %v113 = vadd.f32 %v111, %v112
      %v114 = vrot.slane %v113, 1
      %v115 = vadd.f32 %v113, %v114
      %s116 = vtos %v115
      %s117 = ssub.f32 %s105, %s116
      %s118 = smul.f32 %s117, 0.01
      %s119 = sadd.f32 %s118, 0.0
      %v120 = vld [vmem:[%s4] sm:$0x1]
      %v121 = vand.u32 2147483647, %v120
      %vm122 = vcmask 253952
      %v123 = vsel %vm122, %v121, 0.0
      %124 = vadd.xlane.f32.xlu0 %v123
      %v125 = vpop.xlane.xlu0 %124
      %v126 = vrot.slane %v125, 4
      %v127 = vadd.f32 %v125, %v126
      %v128 = vrot.slane %v127, 2
      %v129 = vadd.f32 %v127, %v128
      %v130 = vrot.slane %v129, 1
      %v131 = vadd.f32 %v129, %v130
      %s132 = vtos %v131
      %s133 = sadd.f32 %s119, %s132
      %p134 = scmp.eq.s32.totalorder 0, 0
      %s135 = scalar_select %p134, 1, 0
      %s136 = scvt.s32.f32 %s135
      %v137 = vlaneseq
      %v138 = vshrl.u32 %v137, 7
      %v139 = vlaneseq
      %v140 = vand.u32 %v139, 127
      %vm141 = vcmp.eq.s32.totalorder %v138, 0
      %vm142 = vcmp.eq.s32.totalorder %v140, 0
      %vm143 = vmand %vm141, %vm142
      %s144 = smul.f32 %s133, %s136
      %v145 = vstv %s144
      %v146 = vsel %vm143, %v145, 0.0
      %v147 = vadd.f32 %v93, %v146
      %148 = vst.msk [vmem:[#allocation8] sm:$0xff] %vm87, %v147
    $region37: #{tpu_custom_call.1} parent=1 // pred_fallthru
      _
    // Predicated region
    $region38: #{tpu_custom_call.1} parent=1 // pred_check
      _
    $region39: #{tpu_custom_call.1} parent=1 // pred_check_branch
      %150 = sbr.rel (0) target = $region41
    $region40: #{tpu_custom_call.1} parent=1 // pred_region
      %s152 = ssub.s32 128, 128
      %153 = vsyncadd [#allocation5], %s152
      %s155 = sshll.u32 [#allocation8], 4
      %s156 = int_to_ptr.vmem [resolvable:$true] %s155
      %158 = dma.vmem_to_hbm [thread:$0]  %s156, 128, %s5, [#allocation5]
    $region41: #{tpu_custom_call.1} parent=1 // pred_fallthru
      _
    // Predicated region
    $region42: #{tpu_custom_call.1} parent=1 // pred_check
      _
    $region43: #{tpu_custom_call.1} parent=1 // pred_check_branch
      %160 = sbr.rel (0) target = $region45
    $region44: #{tpu_custom_call.1} parent=1 // pred_region
      %161 = dma.done [#allocation5], 128
    $region45: #{tpu_custom_call.1} parent=1 // pred_fallthru
      _
    %162 = vsyncpa [#allocation4], 1
    %163 = vsyncpa [#allocation7], 1
    %164 = vsyncpa [#allocation5], 1

</llo_original>
